<compile_context>
chip_gen: v7x
topology: tpu7x:2x2x1
jax: 0.10.0
libtpu: 0.0.40
codegen_flags: <defaults>
</compile_context>

<pallas_src>
import jax
import jax.numpy as jnp
from jax.experimental import pallas as pl
from jax.experimental.pallas import tpu as pltpu


def _sigmoid(s):
    # exp -> EUP slot; approximate reciprocal -> EUP vrcp (no VPU divide).
    return pl.reciprocal(1.0 + jnp.exp(-s), approx=True)


def mlp_kernel(xt_ref, w1_ref, w2_ref, o_ref):
    """Forward pass for one batch tile.

    xt_ref: (inputSize, TILE_B) f32 in VMEM   -- batch along lanes
    w1_ref: (inputSize, hiddenSize) f32 in SMEM
    w2_ref: (hiddenSize, 1) f32 in SMEM
    o_ref:  (1, TILE_B) f32 in VMEM           -- lane-dense output row
    """
    xt = xt_ref[...]                      # (IN, TB)
    in_size = xt.shape[0]
    hidden = w1_ref.shape[1]

    acc = None
    for h in range(hidden):
        # z_h[b] = sum_k W1[k, h] * X[b, k]   (scalar * lane-vector FMAs, VPU)
        z_h = w1_ref[0, h] * xt[0:1, :]
        for k in range(1, in_size):
            z_h = z_h + w1_ref[k, h] * xt[k:k + 1, :]
        z2_h = _sigmoid(z_h)              # (1, TB) hidden activation
        term = w2_ref[h, 0] * z2_h        # second "matmul": hidden=3 FMAs
        acc = term if acc is None else acc + term
    o_ref[...] = _sigmoid(acc).astype(o_ref.dtype)


def neural_network_forward(x, w1, w2, *, max_tile_b=1024):
    """o = sigmoid(sigmoid(x @ w1) @ w2), x: [B, in], w1: [in, hid], w2: [hid, 1]."""
    B, in_size = x.shape
    hidden = w1.shape[1]
    out_size = w2.shape[1]

    # Lane-dense layout: batch maps to the lane axis.
    xt = x.astype(jnp.float32).T          # (in_size, B)

    if B <= max_tile_b:
        tb, b_pad = B, B                  # single block == full array dim: legal
    else:
        tb = max_tile_b                   # multiple of 128 -> legal lane tiling
        b_pad = pl.cdiv(B, tb) * tb
    if b_pad != B:
        xt = jnp.pad(xt, ((0, 0), (0, b_pad - B)))

    grid = (b_pad // tb,)

    cost = pl.CostEstimate(
        flops=2 * b_pad * (in_size * hidden + hidden * out_size),
        transcendentals=b_pad * (hidden + out_size),
        bytes_accessed=4 * (in_size * b_pad + in_size * hidden
                            + hidden * out_size + b_pad),
    )

    o_row = pl.pallas_call(
        mlp_kernel,
        out_shape=jax.ShapeDtypeStruct((1, b_pad), jnp.float32),
        grid=grid,
        in_specs=[
            pl.BlockSpec((in_size, tb), lambda i: (0, i)),      # VMEM, tiled over batch
            pl.BlockSpec(memory_space=pltpu.SMEM),              # W1 scalars
            pl.BlockSpec(memory_space=pltpu.SMEM),              # W2 scalars
        ],
        out_specs=pl.BlockSpec((1, tb), lambda i: (0, i)),
        compiler_params=pltpu.CompilerParams(
            dimension_semantics=("parallel",)),                 # megacore on v7x
        cost_estimate=cost,
    )(xt, w1, w2)

    # Back to the PyTorch layout [B, outputSize].
    return o_row[0, :B].reshape(B, out_size)


if __name__ == "__main__":
    input_size, hidden_size, output_size = 4, 3, 1
    batch = 8

    key = jax.random.PRNGKey(0)
    kx, kw1, kw2 = jax.random.split(key, 3)

    # Deterministic synthetic inputs (mimicking the script's X / X.max()
    # normalization so values sit in a sensible range).
    X_raw = jax.random.uniform(kx, (batch, input_size), jnp.float32,
                               minval=1.0, maxval=100.0)
    X = X_raw / jnp.max(X_raw)

    # Deterministic parameters, same shapes as torch.randn in __init__.
    W1 = jax.random.normal(kw1, (input_size, hidden_size), jnp.float32)
    W2 = jax.random.normal(kw2, (hidden_size, output_size), jnp.float32)

    o = jax.jit(neural_network_forward)(X, W1, W2)
    o = jax.block_until_ready(o)

    # Pure-JAX reference of the forward semantics (exact sigmoid).
    z2_ref = 1.0 / (1.0 + jnp.exp(-(X @ W1)))
    o_ref = 1.0 / (1.0 + jnp.exp(-(z2_ref @ W2)))
    assert o.shape == (batch, output_size)
    # Tolerance accounts for the EUP approximate reciprocal (approx=True) used
    # inside the kernel's sigmoid; the exact math otherwise matches.
    assert jnp.allclose(o, o_ref, atol=1e-2, rtol=1e-2)

    # TODO(synk): backward()/train() (manual weight update), saveWeights and
    # predict are host-side / training utilities -- only forward is implemented.
    print("KERNEL_OK")
</pallas_src>

<mosaic_0001>
module attributes {stable_mosaic.version = 11 : i64} {
  func.func @mlp_kernel(%arg0: i32, %arg1: memref<4x8xf32, #tpu.memory_space<vmem>>, %arg2: memref<4x3xf32, #tpu.memory_space<smem>>, %arg3: memref<3x1xf32, #tpu.memory_space<smem>>, %arg4: memref<1x8xf32, #tpu.memory_space<vmem>>) attributes {dimension_semantics = [#tpu.dimension_semantics<parallel>], iteration_bounds = array<i64: 1>, scalar_prefetch = 0 : i64, scratch_operands = 0 : i64, tpu.core_type = #tpu.core_type<tc>, window_params = [{transform_indices = @transform_0, window_bounds = array<i64: 4, 8>}, {transform_indices = @transform_1, window_bounds = array<i64: 4, 3>}, {transform_indices = @transform_2, window_bounds = array<i64: 3, 1>}, {transform_indices = @transform_3, window_bounds = array<i64: 1, 8>}]} {
    %c0 = arith.constant 0 : index
    %c0_0 = arith.constant 0 : index
    %0 = vector.load %arg1[%c0, %c0_0] : memref<4x8xf32, #tpu.memory_space<vmem>>, vector<4x8xf32>
    %c0_1 = arith.constant 0 : index
    %c0_2 = arith.constant 0 : index
    %1 = memref.load %arg2[%c0_1, %c0_2] : memref<4x3xf32, #tpu.memory_space<smem>>
    %2 = vector.extract_strided_slice %0 {offsets = [0, 0], sizes = [1, 8], strides = [1, 1]} : vector<4x8xf32> to vector<1x8xf32>
    %3 = vector.broadcast %1 : f32 to vector<1x8xf32>
    %4 = arith.mulf %3, %2 : vector<1x8xf32>
    %c1 = arith.constant 1 : index
    %c0_3 = arith.constant 0 : index
    %5 = memref.load %arg2[%c1, %c0_3] : memref<4x3xf32, #tpu.memory_space<smem>>
    %6 = vector.extract_strided_slice %0 {offsets = [1, 0], sizes = [1, 8], strides = [1, 1]} : vector<4x8xf32> to vector<1x8xf32>
    %7 = vector.broadcast %5 : f32 to vector<1x8xf32>
    %8 = arith.mulf %7, %6 : vector<1x8xf32>
    %9 = arith.addf %4, %8 : vector<1x8xf32>
    %c2 = arith.constant 2 : index
    %c0_4 = arith.constant 0 : index
    %10 = memref.load %arg2[%c2, %c0_4] : memref<4x3xf32, #tpu.memory_space<smem>>
    %11 = vector.extract_strided_slice %0 {offsets = [2, 0], sizes = [1, 8], strides = [1, 1]} : vector<4x8xf32> to vector<1x8xf32>
    %12 = vector.broadcast %10 : f32 to vector<1x8xf32>
    %13 = arith.mulf %12, %11 : vector<1x8xf32>
    %14 = arith.addf %9, %13 : vector<1x8xf32>
    %c3 = arith.constant 3 : index
    %c0_5 = arith.constant 0 : index
    %15 = memref.load %arg2[%c3, %c0_5] : memref<4x3xf32, #tpu.memory_space<smem>>
    %16 = vector.extract_strided_slice %0 {offsets = [3, 0], sizes = [1, 8], strides = [1, 1]} : vector<4x8xf32> to vector<1x8xf32>
    %17 = vector.broadcast %15 : f32 to vector<1x8xf32>
    %18 = arith.mulf %17, %16 : vector<1x8xf32>
    %19 = arith.addf %14, %18 : vector<1x8xf32>
    %cst = arith.constant 0.000000e+00 : f32
    %20 = vector.broadcast %cst : f32 to vector<1x8xf32>
    %21 = arith.subf %20, %19 : vector<1x8xf32>
    %22 = math.exp %21 : vector<1x8xf32>
    %cst_6 = arith.constant 1.000000e+00 : f32
    %23 = vector.broadcast %cst_6 : f32 to vector<1x8xf32>
    %24 = arith.addf %23, %22 : vector<1x8xf32>
    %25 = tpu.reciprocal %24 {approx = true} : vector<1x8xf32> -> vector<1x8xf32>
    %c0_7 = arith.constant 0 : index
    %c0_8 = arith.constant 0 : index
    %26 = memref.load %arg3[%c0_7, %c0_8] : memref<3x1xf32, #tpu.memory_space<smem>>
    %27 = vector.broadcast %26 : f32 to vector<1x8xf32>
    %28 = arith.mulf %27, %25 : vector<1x8xf32>
    %c0_9 = arith.constant 0 : index
    %c1_10 = arith.constant 1 : index
    %29 = memref.load %arg2[%c0_9, %c1_10] : memref<4x3xf32, #tpu.memory_space<smem>>
    %30 = vector.extract_strided_slice %0 {offsets = [0, 0], sizes = [1, 8], strides = [1, 1]} : vector<4x8xf32> to vector<1x8xf32>
    %31 = vector.broadcast %29 : f32 to vector<1x8xf32>
    %32 = arith.mulf %31, %30 : vector<1x8xf32>
    %c1_11 = arith.constant 1 : index
    %c1_12 = arith.constant 1 : index
    %33 = memref.load %arg2[%c1_11, %c1_12] : memref<4x3xf32, #tpu.memory_space<smem>>
    %34 = vector.extract_strided_slice %0 {offsets = [1, 0], sizes = [1, 8], strides = [1, 1]} : vector<4x8xf32> to vector<1x8xf32>
    %35 = vector.broadcast %33 : f32 to vector<1x8xf32>
    %36 = arith.mulf %35, %34 : vector<1x8xf32>
    %37 = arith.addf %32, %36 : vector<1x8xf32>
    %c2_13 = arith.constant 2 : index
    %c1_14 = arith.constant 1 : index
    %38 = memref.load %arg2[%c2_13, %c1_14] : memref<4x3xf32, #tpu.memory_space<smem>>
    %39 = vector.extract_strided_slice %0 {offsets = [2, 0], sizes = [1, 8], strides = [1, 1]} : vector<4x8xf32> to vector<1x8xf32>
    %40 = vector.broadcast %38 : f32 to vector<1x8xf32>
    %41 = arith.mulf %40, %39 : vector<1x8xf32>
    %42 = arith.addf %37, %41 : vector<1x8xf32>
    %c3_15 = arith.constant 3 : index
    %c1_16 = arith.constant 1 : index
    %43 = memref.load %arg2[%c3_15, %c1_16] : memref<4x3xf32, #tpu.memory_space<smem>>
    %44 = vector.extract_strided_slice %0 {offsets = [3, 0], sizes = [1, 8], strides = [1, 1]} : vector<4x8xf32> to vector<1x8xf32>
    %45 = vector.broadcast %43 : f32 to vector<1x8xf32>
    %46 = arith.mulf %45, %44 : vector<1x8xf32>
    %47 = arith.addf %42, %46 : vector<1x8xf32>
    %cst_17 = arith.constant 0.000000e+00 : f32
    %48 = vector.broadcast %cst_17 : f32 to vector<1x8xf32>
    %49 = arith.subf %48, %47 : vector<1x8xf32>
    %50 = math.exp %49 : vector<1x8xf32>
    %cst_18 = arith.constant 1.000000e+00 : f32
    %51 = vector.broadcast %cst_18 : f32 to vector<1x8xf32>
    %52 = arith.addf %51, %50 : vector<1x8xf32>
    %53 = tpu.reciprocal %52 {approx = true} : vector<1x8xf32> -> vector<1x8xf32>
    %c1_19 = arith.constant 1 : index
    %c0_20 = arith.constant 0 : index
    %54 = memref.load %arg3[%c1_19, %c0_20] : memref<3x1xf32, #tpu.memory_space<smem>>
    %55 = vector.broadcast %54 : f32 to vector<1x8xf32>
    %56 = arith.mulf %55, %53 : vector<1x8xf32>
    %57 = arith.addf %28, %56 : vector<1x8xf32>
    %c0_21 = arith.constant 0 : index
    %c2_22 = arith.constant 2 : index
    %58 = memref.load %arg2[%c0_21, %c2_22] : memref<4x3xf32, #tpu.memory_space<smem>>
    %59 = vector.extract_strided_slice %0 {offsets = [0, 0], sizes = [1, 8], strides = [1, 1]} : vector<4x8xf32> to vector<1x8xf32>
    %60 = vector.broadcast %58 : f32 to vector<1x8xf32>
    %61 = arith.mulf %60, %59 : vector<1x8xf32>
    %c1_23 = arith.constant 1 : index
    %c2_24 = arith.constant 2 : index
    %62 = memref.load %arg2[%c1_23, %c2_24] : memref<4x3xf32, #tpu.memory_space<smem>>
    %63 = vector.extract_strided_slice %0 {offsets = [1, 0], sizes = [1, 8], strides = [1, 1]} : vector<4x8xf32> to vector<1x8xf32>
    %64 = vector.broadcast %62 : f32 to vector<1x8xf32>
    %65 = arith.mulf %64, %63 : vector<1x8xf32>
    %66 = arith.addf %61, %65 : vector<1x8xf32>
    %c2_25 = arith.constant 2 : index
    %c2_26 = arith.constant 2 : index
    %67 = memref.load %arg2[%c2_25, %c2_26] : memref<4x3xf32, #tpu.memory_space<smem>>
    %68 = vector.extract_strided_slice %0 {offsets = [2, 0], sizes = [1, 8], strides = [1, 1]} : vector<4x8xf32> to vector<1x8xf32>
    %69 = vector.broadcast %67 : f32 to vector<1x8xf32>
    %70 = arith.mulf %69, %68 : vector<1x8xf32>
    %71 = arith.addf %66, %70 : vector<1x8xf32>
    %c3_27 = arith.constant 3 : index
    %c2_28 = arith.constant 2 : index
    %72 = memref.load %arg2[%c3_27, %c2_28] : memref<4x3xf32, #tpu.memory_space<smem>>
    %73 = vector.extract_strided_slice %0 {offsets = [3, 0], sizes = [1, 8], strides = [1, 1]} : vector<4x8xf32> to vector<1x8xf32>
    %74 = vector.broadcast %72 : f32 to vector<1x8xf32>
    %75 = arith.mulf %74, %73 : vector<1x8xf32>
    %76 = arith.addf %71, %75 : vector<1x8xf32>
    %cst_29 = arith.constant 0.000000e+00 : f32
    %77 = vector.broadcast %cst_29 : f32 to vector<1x8xf32>
    %78 = arith.subf %77, %76 : vector<1x8xf32>
    %79 = math.exp %78 : vector<1x8xf32>
    %cst_30 = arith.constant 1.000000e+00 : f32
    %80 = vector.broadcast %cst_30 : f32 to vector<1x8xf32>
    %81 = arith.addf %80, %79 : vector<1x8xf32>
    %82 = tpu.reciprocal %81 {approx = true} : vector<1x8xf32> -> vector<1x8xf32>
    %c2_31 = arith.constant 2 : index
    %c0_32 = arith.constant 0 : index
    %83 = memref.load %arg3[%c2_31, %c0_32] : memref<3x1xf32, #tpu.memory_space<smem>>
    %84 = vector.broadcast %83 : f32 to vector<1x8xf32>
    %85 = arith.mulf %84, %82 : vector<1x8xf32>
    %86 = arith.addf %57, %85 : vector<1x8xf32>
    %cst_33 = arith.constant 0.000000e+00 : f32
    %87 = vector.broadcast %cst_33 : f32 to vector<1x8xf32>
    %88 = arith.subf %87, %86 : vector<1x8xf32>
    %89 = math.exp %88 : vector<1x8xf32>
    %cst_34 = arith.constant 1.000000e+00 : f32
    %90 = vector.broadcast %cst_34 : f32 to vector<1x8xf32>
    %91 = arith.addf %90, %89 : vector<1x8xf32>
    %92 = tpu.reciprocal %91 {approx = true} : vector<1x8xf32> -> vector<1x8xf32>
    %c0_35 = arith.constant 0 : index
    %c0_36 = arith.constant 0 : index
    %93 = vector.load %arg4[%c0_35, %c0_36] : memref<1x8xf32, #tpu.memory_space<vmem>>, vector<1x8xf32>
    tpu.vector_store %arg4[%c0_35, %c0_36], %92 {strides = array<i32>} : memref<1x8xf32, #tpu.memory_space<vmem>>, vector<1x8xf32>,
    return
  }
  func.func @transform_0(%arg0: i32) -> (i32, i32) {
    %c0_i32 = arith.constant 0 : i32
    %c0_i32_0 = arith.constant 0 : i32
    return %c0_i32, %arg0 : i32, i32
  }
  func.func @transform_1(%arg0: i32) -> (i32, i32) {
    %c0_i32 = arith.constant 0 : i32
    %c0_i32_0 = arith.constant 0 : i32
    %c0_i32_1 = arith.constant 0 : i32
    return %c0_i32, %c0_i32_0 : i32, i32
  }
  func.func @transform_2(%arg0: i32) -> (i32, i32) {
    %c0_i32 = arith.constant 0 : i32
    %c0_i32_0 = arith.constant 0 : i32
    %c0_i32_1 = arith.constant 0 : i32
    return %c0_i32, %c0_i32_0 : i32, i32
  }
  func.func @transform_3(%arg0: i32) -> (i32, i32) {
    %c0_i32 = arith.constant 0 : i32
    %c0_i32_0 = arith.constant 0 : i32
    return %c0_i32, %arg0 : i32, i32
  }
}

</mosaic_0001>

<llo_original>
// kernel: neural_network_forward.1
$region0: #{neural_network_forward.1}
  #allocation0 [shape = 'u32[]', space=smem, size = 0x4, offset = 0x4, fixed_abs, tag = 'smem constant byte address 0x4 - core index']
  #allocation1 [shape = 'u32[144,128]{1,0:T(1,128)}', space=vmem, size = 0x12000, scoped, tag = 'internal scratch']
  %s0 = inlined_call_operand.vmem [shape: f32[4,8], index: 0, kind: input, shape index: {}]
  %s1 = inlined_call_operand.vmem [shape: f32[4,3], index: 1, kind: input, shape index: {}]
  %s2 = inlined_call_operand.vmem [shape: f32[3,1], index: 2, kind: input, shape index: {}]
  %s3 = inlined_call_operand.hbm [shape: f32[1,8], index: 3, kind: output, shape index: {}]
  %s4 = sld [smem:[#allocation0]]
  $region30: #{neural_network_forward.1} parent=0
    _
  %s6 = ssub.s32 1, %s4
  %s7 = scalar_select 0, %s6, %s4
  $region1: #{neural_network_forward.1} parent=0
    #allocation2 [shape = 'u8[2048]{0}', space=smem, size = 0x800, scoped, tag = 'input window, operand 1, single buffered']
    #allocation3 [shape = 's32[1]{0}', space=sflag, size = 0x4, scoped, tag = 'scoped memory for neural_network_forward.1']
    #allocation4 [shape = 's32[1]{0}', space=sflag, size = 0x4, scoped, tag = 'scoped memory for neural_network_forward.1']
    #allocation5 [shape = 'u8[2048]{0}', space=smem, size = 0x800, scoped, tag = 'input window, operand 2, single buffered']
    #allocation6 [shape = 's32[1]{0}', space=sflag, size = 0x4, scoped, tag = 'scoped memory for neural_network_forward.1']
    #allocation7 [shape = 'u8[512]{0}', space=vmem, size = 0x400, scoped, tag = 'output window, operand 0, single buffered']
    %8 = vsyncpa [#allocation4], 0
    %9 = vsyncpa [#allocation6], 0
    %10 = vsyncpa [#allocation3], 0
    // Predicated region
    $region2: #{neural_network_forward.1} parent=1 // pred_check
      _
    $region3: #{neural_network_forward.1} parent=1 // pred_check_branch
      %12 = sbr.rel (0) target = $region5
    $region4: #{neural_network_forward.1} parent=1 // pred_region
      _
    $region5: #{neural_network_forward.1} parent=1 // pred_fallthru
      _
    // Predicated region
    $region6: #{neural_network_forward.1} parent=1 // pred_check
      _
    $region7: #{neural_network_forward.1} parent=1 // pred_check_branch
      %14 = sbr.rel (0) target = $region9
    $region8: #{neural_network_forward.1} parent=1 // pred_region
      %s16 = ssub.s32 64, 64
      %17 = vsyncadd [#allocation4], %s16
      %s19 = sshll.u32 %s1, 4
      %s20 = int_to_ptr.vmem [resolvable:$true] %s19
      %22 = dma.vmem_to_smem %s20, 64, [#allocation2], [#allocation4]
    $region9: #{neural_network_forward.1} parent=1 // pred_fallthru
      _
    // Predicated region
    $region10: #{neural_network_forward.1} parent=1 // pred_check
      _
    $region11: #{neural_network_forward.1} parent=1 // pred_check_branch
      %24 = sbr.rel (0) target = $region13
    $region12: #{neural_network_forward.1} parent=1 // pred_region
      %s26 = ssub.s32 64, 64
      %27 = vsyncadd [#allocation6], %s26
      %s29 = sshll.u32 %s2, 4
      %s30 = int_to_ptr.vmem [resolvable:$true] %s29
      %32 = dma.vmem_to_smem %s30, 64, [#allocation5], [#allocation6]
    $region13: #{neural_network_forward.1} parent=1 // pred_fallthru
      _
    // Predicated region
    $region14: #{neural_network_forward.1} parent=1 // pred_check
      _
    $region15: #{neural_network_forward.1} parent=1 // pred_check_branch
      %34 = sbr.rel (0) target = $region17
    $region16: #{neural_network_forward.1} parent=1 // pred_region
      %35 = dma.done [#allocation4], 64
    $region17: #{neural_network_forward.1} parent=1 // pred_fallthru
      _
    // Predicated region
    $region18: #{neural_network_forward.1} parent=1 // pred_check
      _
    $region19: #{neural_network_forward.1} parent=1 // pred_check_branch
      %37 = sbr.rel (0) target = $region21
    $region20: #{neural_network_forward.1} parent=1 // pred_region
      %38 = dma.done [#allocation6], 64
    $region21: #{neural_network_forward.1} parent=1 // pred_fallthru
      _
    %39 = sfence
    %v40 = vld [vmem:[%s0] sm:$0xf]
    %s41 = sld [smem:[#allocation2]]
    %v42 = vstv %s41
    %v43 = vmul.f32 %v42, %v40
    %s44 = sld [smem:[#allocation2 + $0x80]]
    %v45 = vstv %s44
    %v46 = vmul.f32 %v45, %v40
    %v48 = vrot.slane %v46, 1
    %v50 = vadd.f32 %v43, %v48
    %s51 = sld [smem:[#allocation2 + $0x100]]
    %v52 = vstv %s51
    %v53 = vmul.f32 %v52, %v40
    %v55 = vrot.slane %v53, 2
    %v57 = vadd.f32 %v50, %v55
    %s58 = sld [smem:[#allocation2 + $0x180]]
    %v59 = vstv %s58
    %v60 = vmul.f32 %v59, %v40
    %v62 = vrot.slane %v60, 3
    %v64 = vadd.f32 %v57, %v62
    %v65 = vsub.f32 0.0, %v64
    %v66 = vmul.f32 %v65, 1.442695
    %v67 = vpow.pop %v66
    %v68 = vadd.f32 %v67, 1.0
    %v69 = vrcp.pop %v68
    %s70 = sld [smem:[#allocation5]]
    %v71 = vstv %s70
    %v72 = vmul.f32 %v71, %v69
    %s73 = sld [smem:[#allocation2 + $0x1]]
    %v74 = vstv %s73
    %v75 = vmul.f32 %v74, %v40
    %s76 = sld [smem:[#allocation2 + $0x81]]
    %v77 = vstv %s76
    %v78 = vmul.f32 %v77, %v40
    %v80 = vrot.slane %v78, 1
    %v82 = vadd.f32 %v75, %v80
    %s83 = sld [smem:[#allocation2 + $0x101]]
    %v84 = vstv %s83
    %v85 = vmul.f32 %v84, %v40
    %v87 = vrot.slane %v85, 2
    %v89 = vadd.f32 %v82, %v87
    %s90 = sld [smem:[#allocation2 + $0x181]]
    %v91 = vstv %s90
    %v92 = vmul.f32 %v91, %v40
    %v94 = vrot.slane %v92, 3
    %v96 = vadd.f32 %v89, %v94
    %v97 = vsub.f32 0.0, %v96
    %v98 = vmul.f32 %v97, 1.442695
    %v99 = vpow.pop %v98
    %v100 = vadd.f32 %v99, 1.0
    %v101 = vrcp.pop %v100
    %s102 = sld [smem:[#allocation5 + $0x80]]
    %v103 = vstv %s102
    %v104 = vmul.f32 %v103, %v101
    %v105 = vadd.f32 %v72, %v104
    %s106 = sld [smem:[#allocation2 + $0x2]]
    %v107 = vstv %s106
    %v108 = vmul.f32 %v107, %v40
    %s109 = sld [smem:[#allocation2 + $0x82]]
    %v110 = vstv %s109
    %v111 = vmul.f32 %v110, %v40
    %v113 = vrot.slane %v111, 1
    %v115 = vadd.f32 %v108, %v113
    %s116 = sld [smem:[#allocation2 + $0x102]]
    %v117 = vstv %s116
    %v118 = vmul.f32 %v117, %v40
    %v120 = vrot.slane %v118, 2
    %v122 = vadd.f32 %v115, %v120
    %s123 = sld [smem:[#allocation2 + $0x182]]
    %v124 = vstv %s123
    %v125 = vmul.f32 %v124, %v40
    %v127 = vrot.slane %v125, 3
    %v129 = vadd.f32 %v122, %v127
    %v130 = vsub.f32 0.0, %v129
    %v131 = vmul.f32 %v130, 1.442695
    %v132 = vpow.pop %v131
    %v133 = vadd.f32 %v132, 1.0
    %v134 = vrcp.pop %v133
    %s135 = sld [smem:[#allocation5 + $0x100]]
    %v136 = vstv %s135
    %v137 = vmul.f32 %v136, %v134
    %v138 = vadd.f32 %v105, %v137
    %v139 = vsub.f32 0.0, %v138
    %v140 = vmul.f32 %v139, 1.442695
    %v141 = vpow.pop %v140
    %v142 = vadd.f32 %v141, 1.0
    %v143 = vrcp.pop %v142
    %vm144 = vcmask 57344
    %145 = vst.msk [vmem:[#allocation7] sm:$0x1] %vm144, %v143
    // Predicated region
    $region22: #{neural_network_forward.1} parent=1 // pred_check
      _
    $region23: #{neural_network_forward.1} parent=1 // pred_check_branch
      %147 = sbr.rel (0) target = $region25
    $region24: #{neural_network_forward.1} parent=1 // pred_region
      %s149 = ssub.s32 16, 16
      %150 = vsyncadd [#allocation3], %s149
      %s152 = sshll.u32 [#allocation7], 4
      %s153 = int_to_ptr.vmem [resolvable:$true] %s152
      %155 = dma.vmem_to_hbm [thread:$0]  %s153, 16, %s3, [#allocation3]
    $region25: #{neural_network_forward.1} parent=1 // pred_fallthru
      _
    // Predicated region
    $region26: #{neural_network_forward.1} parent=1 // pred_check
      _
    $region27: #{neural_network_forward.1} parent=1 // pred_check_branch
      %157 = sbr.rel (0) target = $region29
    $region28: #{neural_network_forward.1} parent=1 // pred_region
      %158 = dma.done [#allocation3], 16
    $region29: #{neural_network_forward.1} parent=1 // pred_fallthru
      _
    %159 = vsyncpa [#allocation3], 1
    %160 = vsyncpa [#allocation4], 1
    %161 = vsyncpa [#allocation6], 1

</llo_original>
